<compile_context>
chip_gen: v7x
topology: tpu7x:2x2x1
jax: 0.10.0
libtpu: 0.0.40
codegen_flags: <defaults>
</compile_context>

<pallas_src>
import jax
import jax.numpy as jnp
from jax.experimental import pallas as pl
from jax.experimental.pallas import tpu as pltpu

EMBED_DIM = 512  # fixed by nn.Linear(512, num_classes) in the module
LANE = 128
SUBLANE = 8


def _round_up(v, m):
    return ((v + m - 1) // m) * m


def facenet_classifier_kernel(x_ref, w_emb_ref, b_emb_ref, w_fc_ref, b_fc_ref,
                              logits_ref, emb_ref):
    # x_ref:      [TILE_B, C, H*W]  bf16, native NCHW-flattened layout
    # w_emb_ref:  [C, 512]          bf16 synthetic-backbone projection
    # b_emb_ref:  [1, 512]          f32
    # w_fc_ref:   [NC_pad, 512]     bf16 classifier weight (PyTorch layout, padded)
    # b_fc_ref:   [1, NC_pad]       f32
    x = x_ref[...].astype(jnp.float32)                        # upcast BEFORE accumulating
    hw = x.shape[-1]

    # Global average pool over the spatial (lane) axis: XLU cross-lane reduce, free
    # in this HBM-bound kernel; the pooled result keeps C as the matmul K-dim.
    feat = jnp.sum(x, axis=-1) * jnp.float32(1.0 / hw)        # [TILE_B, C] f32

    # Embedding projection on the MXU in bf16 with f32 accumulation.
    emb = jnp.dot(feat.astype(jnp.bfloat16), w_emb_ref[...],
                  preferred_element_type=jnp.float32) + b_emb_ref[...]   # [TILE_B, 512]

    # L2-normalize (F.normalize semantics: x / max(||x||, 1e-12)) via rsqrt on the EUP.
    sq = jnp.sum(emb * emb, axis=-1, keepdims=True)           # [TILE_B, 1]
    emb_n = emb * jax.lax.rsqrt(jnp.maximum(sq, 1e-24))       # [TILE_B, 512]
    emb_ref[...] = emb_n.astype(emb_ref.dtype)

    # Classifier head: logits = emb_n @ w_fc^T + b_fc.  Contract over the last dims so
    # the [NC, 512] PyTorch weight is consumed without any wrapper transpose.
    logits = jax.lax.dot_general(
        emb_n.astype(jnp.bfloat16), w_fc_ref[...],
        dimension_numbers=(((1,), (1,)), ((), ())),
        preferred_element_type=jnp.float32) + b_fc_ref[...]   # [TILE_B, NC_pad]
    logits_ref[...] = logits.astype(logits_ref.dtype)


def _vmem_budget():
    """Returns (tile working-set budget, vmem_limit_bytes), generation-aware."""
    try:
        cap = pltpu.get_tpu_info().vmem_capacity_bytes
    except Exception:
        cap = 64 * 1024 * 1024                       # conservative (v7x-sized) fallback
    if cap >= 100 * 1024 * 1024:                     # v5e / v6e: 128 MiB physical VMEM
        return 96 * 1024 * 1024, 100 * 1024 * 1024
    return 32 * 1024 * 1024, 48 * 1024 * 1024        # v7x: 64 MiB physical VMEM


def _pick_tile_b(B, C, HW, nc_pad, budget_bytes):
    """Largest batch tile whose VMEM working set (with real tile padding) fits."""
    # x block [tile_b, C, HW] bf16: C pads to 16 sublanes (bf16 packing), HW to 128
    # lanes; double-buffered.  Output tiles (f32, lane-dense) also double-buffered.
    c_sub = _round_up(C, 16)
    hw_lane = _round_up(HW, LANE)
    per_row = 2 * c_sub * hw_lane * 2 + 2 * (nc_pad + EMBED_DIM) * 4
    # Resident weights/biases: SINGLE-buffered (pl.Buffered(1)), padded layouts.
    fixed = (_round_up(C, 16) * EMBED_DIM * 2          # w_emb bf16
             + nc_pad * EMBED_DIM * 2                  # w_fc bf16
             + SUBLANE * (EMBED_DIM + nc_pad) * 4)     # biases f32, sublane-padded
    avail = max(budget_bytes - fixed, SUBLANE * per_row)
    tile = min(512, avail // per_row)                  # cap raised above 128
    tile = max(SUBLANE, (tile // SUBLANE) * SUBLANE)

    if B <= SUBLANE:
        return int(min(tile, B))                       # tiny batch: one step, no padding

    b_rows = _round_up(B, SUBLANE)
    # Keep >= 2 grid steps when the batch allows, so the "parallel" batch axis can
    # shard across v7x's two TensorCores (negligible cost on single-TC v5e/v6e).
    if b_rows >= 2 * SUBLANE:
        tile = min(tile, _round_up(pl.cdiv(b_rows, 2), SUBLANE))
    return int(min(tile, b_rows))
    # NOTE: for extremely large per-row feature maps or class counts, a second
    # 'arbitrary' grid axis (over H*W or NC) with a VMEM accumulator would be needed.


def facenet_classifier_forward(x, w_emb, b_emb, w_fc, b_fc):
    """x: [B, C, H, W] float32 (NCHW). Returns (logits [B, NC], embedding [B, 512])."""
    B, C, H, W = x.shape
    HW = H * W
    num_classes = w_fc.shape[0]
    nc_pad = _round_up(num_classes, LANE)              # lane-dense logits width

    budget, vmem_limit = _vmem_budget()
    tile_b = _pick_tile_b(B, C, HW, nc_pad, budget)
    b_pad = tile_b * pl.cdiv(B, tile_b)

    # Native layout: [B, C, H*W] is a free reshape of NCHW -- no HBM transpose pass.
    # bf16 cast halves the dominant kernel-side HBM stream; it fuses with the batch
    # pad (and is free if the upstream producer already emits bf16).
    x3d = x.reshape(B, C, HW).astype(jnp.bfloat16)
    if b_pad != B:
        x3d = jnp.pad(x3d, ((0, b_pad - B), (0, 0), (0, 0)))

    # NOTE: for static weights, hoist these pads/casts out of the per-call hot path.
    w_emb_bf = w_emb.astype(jnp.bfloat16)                                      # [C, 512]
    b_emb2 = b_emb.reshape(1, EMBED_DIM).astype(jnp.float32)
    w_fc_p = jnp.pad(w_fc, ((0, nc_pad - num_classes), (0, 0))).astype(jnp.bfloat16)
    b_fc_p = jnp.pad(b_fc, (0, nc_pad - num_classes)).reshape(1, nc_pad).astype(jnp.float32)

    cost = pl.CostEstimate(
        flops=2 * b_pad * EMBED_DIM * (C + nc_pad) + b_pad * C * HW,
        transcendentals=b_pad,
        bytes_accessed=(b_pad * C * HW * 2                        # x (bf16)
                        + (C + nc_pad) * EMBED_DIM * 2            # weights (bf16)
                        + (EMBED_DIM + nc_pad) * 4                # biases (f32)
                        + b_pad * (nc_pad + EMBED_DIM) * 4),      # outputs (f32)
    )

    resident = dict(pipeline_mode=pl.Buffered(1))      # constant index_map -> 1 buffer
    grid = (b_pad // tile_b,)
    logits, emb = pl.pallas_call(
        facenet_classifier_kernel,
        out_shape=(
            jax.ShapeDtypeStruct((b_pad, nc_pad), jnp.float32),
            jax.ShapeDtypeStruct((b_pad, EMBED_DIM), jnp.float32),
        ),
        grid=grid,
        in_specs=[
            pl.BlockSpec((tile_b, C, HW), lambda i: (i, 0, 0)),
            pl.BlockSpec((C, EMBED_DIM), lambda i: (0, 0), **resident),
            pl.BlockSpec((1, EMBED_DIM), lambda i: (0, 0), **resident),
            pl.BlockSpec((nc_pad, EMBED_DIM), lambda i: (0, 0), **resident),
            pl.BlockSpec((1, nc_pad), lambda i: (0, 0), **resident),
        ],
        out_specs=(
            pl.BlockSpec((tile_b, nc_pad), lambda i: (i, 0)),
            pl.BlockSpec((tile_b, EMBED_DIM), lambda i: (i, 0)),
        ),
        compiler_params=pltpu.CompilerParams(
            dimension_semantics=("parallel",),         # batch tiles are independent
            vmem_limit_bytes=vmem_limit,               # generation-aware headroom
        ),
        cost_estimate=cost,
    )(x3d, w_emb_bf, b_emb2, w_fc_p, b_fc_p)

    return logits[:B, :num_classes], emb[:B, :]


if __name__ == "__main__":
    # Small shapes consistent with the forward: NCHW image batch.
    B, C, H, W = 2, 4, 16, 16
    num_classes = 10

    key = jax.random.PRNGKey(0)
    kx, k_wemb, k_bemb, k_wfc, k_bfc = jax.random.split(key, 5)

    x = jax.random.normal(kx, (B, C, H, W), dtype=jnp.float32)

    # Synthetic backbone projection: C -> 512.
    w_emb = jax.random.normal(k_wemb, (C, EMBED_DIM), dtype=jnp.float32) * 0.05
    b_emb = jax.random.normal(k_bemb, (EMBED_DIM,), dtype=jnp.float32) * 0.05
    # Classifier head nn.Linear(512, num_classes): weight [NC, 512], bias [NC].
    fc_bound = 1.0 / jnp.sqrt(jnp.float32(EMBED_DIM))
    w_fc = jax.random.uniform(k_wfc, (num_classes, EMBED_DIM), dtype=jnp.float32,
                              minval=-fc_bound, maxval=fc_bound)
    b_fc = jax.random.uniform(k_bfc, (num_classes,), dtype=jnp.float32,
                              minval=-fc_bound, maxval=fc_bound)

    logits, emb = jax.jit(facenet_classifier_forward)(x, w_emb, b_emb, w_fc, b_fc)
    jax.block_until_ready((logits, emb))

    # Pure-JAX f32 reference (kernel streams x and runs matmuls in bf16 -> relaxed tol).
    feat_ref = jnp.mean(x.reshape(B, C, H * W), axis=-1)
    emb_ref = feat_ref @ w_emb + b_emb
    emb_ref = emb_ref / jnp.maximum(
        jnp.linalg.norm(emb_ref, axis=-1, keepdims=True), 1e-12)
    logits_ref = emb_ref @ w_fc.T + b_fc

    assert logits.shape == (B, num_classes)
    assert emb.shape == (B, EMBED_DIM)
    assert bool(jnp.allclose(emb, emb_ref, atol=1e-2)), "embedding mismatch"
    assert bool(jnp.allclose(logits, logits_ref, atol=2e-2)), "logits mismatch"

    print("KERNEL_OK")
</pallas_src>

<mosaic_0001>
module attributes {stable_mosaic.version = 11 : i64} {
  func.func @facenet_classifier_kernel(%arg0: i32, %arg1: memref<2x4x256xbf16, #tpu.memory_space<vmem>>, %arg2: memref<4x512xbf16, #tpu.memory_space<vmem>>, %arg3: memref<1x512xf32, #tpu.memory_space<vmem>>, %arg4: memref<128x512xbf16, #tpu.memory_space<vmem>>, %arg5: memref<1x128xf32, #tpu.memory_space<vmem>>, %arg6: memref<2x128xf32, #tpu.memory_space<vmem>>, %arg7: memref<2x512xf32, #tpu.memory_space<vmem>>) attributes {dimension_semantics = [#tpu.dimension_semantics<parallel>], iteration_bounds = array<i64: 1>, scalar_prefetch = 0 : i64, scratch_operands = 0 : i64, tpu.core_type = #tpu.core_type<tc>, window_params = [{transform_indices = @transform_0, window_bounds = array<i64: 2, 4, 256>}, {pipeline_mode = #tpu.pipeline_mode<synchronous>, transform_indices = @transform_1, window_bounds = array<i64: 4, 512>}, {pipeline_mode = #tpu.pipeline_mode<synchronous>, transform_indices = @transform_2, window_bounds = array<i64: 1, 512>}, {pipeline_mode = #tpu.pipeline_mode<synchronous>, transform_indices = @transform_3, window_bounds = array<i64: 128, 512>}, {pipeline_mode = #tpu.pipeline_mode<synchronous>, transform_indices = @transform_4, window_bounds = array<i64: 1, 128>}, {transform_indices = @transform_5, window_bounds = array<i64: 2, 128>}, {transform_indices = @transform_6, window_bounds = array<i64: 2, 512>}]} {
    %c0 = arith.constant 0 : index
    %c0_0 = arith.constant 0 : index
    %c0_1 = arith.constant 0 : index
    %0 = vector.load %arg1[%c0, %c0_0, %c0_1] : memref<2x4x256xbf16, #tpu.memory_space<vmem>>, vector<2x4x256xbf16>
    %1 = arith.extf %0 : vector<2x4x256xbf16> to vector<2x4x256xf32>
    %cst = arith.constant dense<0.000000e+00> : vector<2x4xf32>
    %2 = vector.multi_reduction <add>, %1, %cst [2] : vector<2x4x256xf32> to vector<2x4xf32>
    %cst_2 = arith.constant 3.906250e-03 : f32
    %3 = vector.broadcast %cst_2 : f32 to vector<2x4xf32>
    %4 = arith.mulf %2, %3 : vector<2x4xf32>
    %5 = arith.truncf %4 : vector<2x4xf32> to vector<2x4xbf16>
    %c0_3 = arith.constant 0 : index
    %c0_4 = arith.constant 0 : index
    %6 = vector.load %arg2[%c0_3, %c0_4] : memref<4x512xbf16, #tpu.memory_space<vmem>>, vector<4x512xbf16>
    %cst_5 = arith.constant dense<0.000000e+00> : vector<2x512xf32>
    %7 = tpu.matmul %5, %6, %cst_5 {dimension_numbers = #tpu.dot_dimension_numbers<[1], [0], [0], [1], [0, 0, 1, 1], [], []>} : vector<2x4xbf16>, vector<4x512xbf16>, vector<2x512xf32> -> vector<2x512xf32>
    %c0_6 = arith.constant 0 : index
    %c0_7 = arith.constant 0 : index
    %8 = vector.load %arg3[%c0_6, %c0_7] : memref<1x512xf32, #tpu.memory_space<vmem>>, vector<1x512xf32>
    %9 = vector.broadcast %8 : vector<1x512xf32> to vector<2x512xf32>
    %10 = arith.addf %7, %9 : vector<2x512xf32>
    %11 = arith.mulf %10, %10 : vector<2x512xf32>
    %cst_8 = arith.constant dense<0.000000e+00> : vector<2xf32>
    %12 = vector.multi_reduction <add>, %11, %cst_8 [1] : vector<2x512xf32> to vector<2xf32>
    %13 = vector.shape_cast %12 : vector<2xf32> to vector<2x1xf32>
    %cst_9 = arith.constant 1.000000e-24 : f32
    %14 = vector.broadcast %cst_9 : f32 to vector<2x1xf32>
    %15 = arith.maximumf %13, %14 : vector<2x1xf32>
    %16 = math.rsqrt %15 : vector<2x1xf32>
    %17 = vector.broadcast %16 : vector<2x1xf32> to vector<2x512xf32>
    %18 = arith.mulf %10, %17 : vector<2x512xf32>
    %c0_10 = arith.constant 0 : index
    %c0_11 = arith.constant 0 : index
    %19 = vector.load %arg7[%c0_10, %c0_11] : memref<2x512xf32, #tpu.memory_space<vmem>>, vector<2x512xf32>
    tpu.vector_store %arg7[%c0_10, %c0_11], %18 {strides = array<i32>} : memref<2x512xf32, #tpu.memory_space<vmem>>, vector<2x512xf32>,
    %20 = arith.truncf %18 : vector<2x512xf32> to vector<2x512xbf16>
    %c0_12 = arith.constant 0 : index
    %c0_13 = arith.constant 0 : index
    %21 = vector.load %arg4[%c0_12, %c0_13] : memref<128x512xbf16, #tpu.memory_space<vmem>>, vector<128x512xbf16>
    %cst_14 = arith.constant dense<0.000000e+00> : vector<2x128xf32>
    %22 = tpu.matmul %20, %21, %cst_14 {dimension_numbers = #tpu.dot_dimension_numbers<[1], [1], [0], [0], [0, 0, 1, 0], [], []>} : vector<2x512xbf16>, vector<128x512xbf16>, vector<2x128xf32> -> vector<2x128xf32>
    %c0_15 = arith.constant 0 : index
    %c0_16 = arith.constant 0 : index
    %23 = vector.load %arg5[%c0_15, %c0_16] : memref<1x128xf32, #tpu.memory_space<vmem>>, vector<1x128xf32>
    %24 = vector.broadcast %23 : vector<1x128xf32> to vector<2x128xf32>
    %25 = arith.addf %22, %24 : vector<2x128xf32>
    %c0_17 = arith.constant 0 : index
    %c0_18 = arith.constant 0 : index
    %26 = vector.load %arg6[%c0_17, %c0_18] : memref<2x128xf32, #tpu.memory_space<vmem>>, vector<2x128xf32>
    tpu.vector_store %arg6[%c0_17, %c0_18], %25 {strides = array<i32>} : memref<2x128xf32, #tpu.memory_space<vmem>>, vector<2x128xf32>,
    return
  }
  func.func @transform_0(%arg0: i32) -> (i32, i32, i32) {
    %c0_i32 = arith.constant 0 : i32
    %c0_i32_0 = arith.constant 0 : i32
    %c0_i32_1 = arith.constant 0 : i32
    return %arg0, %c0_i32, %c0_i32_0 : i32, i32, i32
  }
  func.func @transform_1(%arg0: i32) -> (i32, i32) {
    %c0_i32 = arith.constant 0 : i32
    %c0_i32_0 = arith.constant 0 : i32
    %c0_i32_1 = arith.constant 0 : i32
    return %c0_i32, %c0_i32_0 : i32, i32
  }
  func.func @transform_2(%arg0: i32) -> (i32, i32) {
    %c0_i32 = arith.constant 0 : i32
    %c0_i32_0 = arith.constant 0 : i32
    %c0_i32_1 = arith.constant 0 : i32
    return %c0_i32, %c0_i32_0 : i32, i32
  }
  func.func @transform_3(%arg0: i32) -> (i32, i32) {
    %c0_i32 = arith.constant 0 : i32
    %c0_i32_0 = arith.constant 0 : i32
    %c0_i32_1 = arith.constant 0 : i32
    return %c0_i32, %c0_i32_0 : i32, i32
  }
  func.func @transform_4(%arg0: i32) -> (i32, i32) {
    %c0_i32 = arith.constant 0 : i32
    %c0_i32_0 = arith.constant 0 : i32
    %c0_i32_1 = arith.constant 0 : i32
    return %c0_i32, %c0_i32_0 : i32, i32
  }
  func.func @transform_5(%arg0: i32) -> (i32, i32) {
    %c0_i32 = arith.constant 0 : i32
    %c0_i32_0 = arith.constant 0 : i32
    return %arg0, %c0_i32 : i32, i32
  }
  func.func @transform_6(%arg0: i32) -> (i32, i32) {
    %c0_i32 = arith.constant 0 : i32
    %c0_i32_0 = arith.constant 0 : i32
    return %arg0, %c0_i32 : i32, i32
  }
}

</mosaic_0001>

<llo_original>
// kernel: facenet_classifier_forward.1
$region0: #{facenet_classifier_forward.1}
  #allocation0 [shape = 'u32[]', space=smem, size = 0x4, offset = 0x4, fixed_abs, tag = 'smem constant byte address 0x4 - core index']
  #allocation1 [shape = 'u32[144,128]{1,0:T(1,128)}', space=vmem, size = 0x12000, scoped, tag = 'internal scratch']
  %s0 = inlined_call_operand.vmem [shape: bf16[2,4,256], index: 0, kind: input, shape index: {}]
  %s1 = inlined_call_operand.vmem [shape: bf16[4,512], index: 1, kind: input, shape index: {}]
  %s2 = inlined_call_operand.vmem [shape: f32[1,512], index: 2, kind: input, shape index: {}]
  %s3 = inlined_call_operand.vmem [shape: bf16[128,512], index: 3, kind: input, shape index: {}]
  %s4 = inlined_call_operand.vmem [shape: f32[1,128], index: 4, kind: input, shape index: {}]
  %s5 = inlined_call_operand.hbm [shape: f32[2,128], index: 5, kind: output, shape index: {0}]
  %s6 = inlined_call_operand.hbm [shape: f32[2,512], index: 6, kind: output, shape index: {1}]
  %7 = xla_tuple %s5, %s6
  %s8 = sld [smem:[#allocation0]]
  $region38: #{facenet_classifier_forward.1} parent=0
    _
  %s10 = ssub.s32 1, %s8
  %s11 = scalar_select 0, %s10, %s8
  $region1: #{facenet_classifier_forward.1} parent=0
    #allocation2 [shape = 'u8[1024]{0}', space=vmem, size = 0x400, scoped, tag = 'output window, operand 0, single buffered']
    #allocation3 [shape = 's32[1]{0}', space=sflag, size = 0x4, scoped, tag = 'scoped memory for facenet_classifier_forward.1']
    #allocation4 [shape = 'u8[4096]{0}', space=vmem, size = 0x1000, scoped, tag = 'output window, operand 1, single buffered']
    #allocation5 [shape = 's32[1]{0}', space=sflag, size = 0x4, scoped, tag = 'scoped memory for facenet_classifier_forward.1']
    %12 = vsyncpa [#allocation3], 0
    %13 = vsyncpa [#allocation5], 0
    // Predicated region
    $region2: #{facenet_classifier_forward.1} parent=1 // pred_check
      _
    $region3: #{facenet_classifier_forward.1} parent=1 // pred_check_branch
      %15 = sbr.rel (0) target = $region5
    $region4: #{facenet_classifier_forward.1} parent=1 // pred_region
      _
    $region5: #{facenet_classifier_forward.1} parent=1 // pred_fallthru
      _
    // Predicated region
    $region6: #{facenet_classifier_forward.1} parent=1 // pred_check
      _
    $region7: #{facenet_classifier_forward.1} parent=1 // pred_check_branch
      %17 = sbr.rel (0) target = $region9
    $region8: #{facenet_classifier_forward.1} parent=1 // pred_region
      _
    $region9: #{facenet_classifier_forward.1} parent=1 // pred_fallthru
      _
    // Predicated region
    $region10: #{facenet_classifier_forward.1} parent=1 // pred_check
      _
    $region11: #{facenet_classifier_forward.1} parent=1 // pred_check_branch
      %19 = sbr.rel (0) target = $region13
    $region12: #{facenet_classifier_forward.1} parent=1 // pred_region
      _
    $region13: #{facenet_classifier_forward.1} parent=1 // pred_fallthru
      _
    // Predicated region
    $region14: #{facenet_classifier_forward.1} parent=1 // pred_check
      _
    $region15: #{facenet_classifier_forward.1} parent=1 // pred_check_branch
      %21 = sbr.rel (0) target = $region17
    $region16: #{facenet_classifier_forward.1} parent=1 // pred_region
      _
    $region17: #{facenet_classifier_forward.1} parent=1 // pred_fallthru
      _
    // Predicated region
    $region18: #{facenet_classifier_forward.1} parent=1 // pred_check
      _
    $region19: #{facenet_classifier_forward.1} parent=1 // pred_check_branch
      %23 = sbr.rel (0) target = $region21
    $region20: #{facenet_classifier_forward.1} parent=1 // pred_region
      _
    $region21: #{facenet_classifier_forward.1} parent=1 // pred_fallthru
      _
    %v25 = vld [vmem:[%s0] sm:$0xf]
    %v26 = vld [vmem:[%s0 + $0x4] sm:$0xf]
    %v27 = vunpack.c.l.bf16 %v25
    %v28 = vunpack.c.l.bf16 %v26
    %v31 = vcombine.high %v27, %v27
    %v32 = vcombine.high %v28, %v28
    %vm35 = vcmask 1043456
    %v36 = vsel %vm35, %v27, 0.0
    %v37 = vsel %vm35, %v31, 0.0
    %v38 = vadd.f32 %v36, %v37
    %39 = vadd.xlane.f32.xlu0 %v38
    %v40 = vpop.xlane.xlu0 %39
    %v41 = vsel %vm35, %v28, 0.0
    %v42 = vsel %vm35, %v32, 0.0
    %v43 = vadd.f32 %v41, %v42
    %44 = vadd.xlane.f32.xlu0 %v43
    %v45 = vpop.xlane.xlu0 %44
    %v46 = vmul.f32 %v40, 0.00390625
    %v47 = vmul.f32 %v45, 0.00390625
    %v48 = vpack.c.bf16 %v46, %v46
    %v49 = vpack.c.bf16 %v47, %v47
    %v50 = vld [vmem:[%s1] sm:$0xff]
    %v51 = vld [vmem:[%s2] sm:$0xf]
    %v53 = vlaneseq
    %v54 = vshrl.u32 %v53, 7
    %v55 = vsub.s32 0, %v54
    %v56 = vrot.slane %v51, %v55
    %v57 = vlaneseq
    %v58 = vshrl.u32 %v57, 7
    %v59 = vsub.s32 1, %v58
    %v60 = vrot.slane %v51, %v59
    %v61 = vlaneseq
    %v62 = vshrl.u32 %v61, 7
    %v63 = vsub.s32 2, %v62
    %v64 = vrot.slane %v51, %v63
    %v65 = vlaneseq
    %v66 = vshrl.u32 %v65, 7
    %v67 = vsub.s32 3, %v66
    %v68 = vrot.slane %v51, %v67
    %v75 = vunpack.c.l.b16 %v48
    %v76 = vunpack.c.l.b16 %v49
    %v77 = vlaneseq
    %v78 = vand.u32 %v77, 127
    %v79 = vlaneseq
    %v80 = vshrl.u32 %v79, 7
    %v81 = vsub.s32 %v78, %v80
    %v82 = vrot.slane %v75, %v81
    %v83 = vlaneseq
    %v84 = vshrl.u32 %v83, 7
    %v85 = vsub.s32 %v78, %v84
    %v86 = vrot.slane %v76, %v85
    %vm87 = vcmask 1041409
    %v88 = vsel %vm87, %v86, %v82
    %v89 = vpack.c.b16 %v88, %v88
    %v91 = vcombine.high %v50, %v50
    %v93 = vunpack.c.l.s4 1983009808
    %v94 = vunpack.c.0.s8 %v93
    %v95 = vlaneseq
    %v96 = vshrl.u32 %v95, 7
    %v97 = vsub.s32 %v94, %v96
    %v98 = vrot.slane %v50, %v97
    %v100 = vunpack.c.l.s4 1983009808
    %v101 = vunpack.c.0.s8 %v100
    %v102 = vlaneseq
    %v103 = vshrl.u32 %v102, 7
    %v104 = vsub.s32 %v101, %v103
    %v105 = vrot.slane %v91, %v104
    %v106 = vcombine.high %v98, %v98
    %v107 = vcombine.high %v105, %v105
    %vm108 = vcmask 31744
    %v110 = vsel %vm108, %v89, 0
    %vm112 = vcmask 1041408
    %v114 = vsel %vm112, %v98, 0
    %v117 = vsel %vm112, %v106, 0
    %v120 = vsel %vm112, %v105, 0
    %v123 = vsel %vm112, %v107, 0
    %125 = vmatprep.subr.bf16.mxu0 %v117
    %126 = vmatpush1.bf16.msra.mxu0 %v114
    %127 = vmatprep.subr.bf16.mxu0 0
    %128 = vmatpush1.bf16.msra.mxu0 0
    %129 = vmatprep.subr.bf16.mxu0 0
    %130 = vmatpush1.bf16.msra.mxu0 0
    %131 = vmatprep.subr.bf16.mxu0 0
    %132 = vmatpush1.bf16.msra.mxu0 0
    %133 = vmatprep.subr.bf16.mxu0 0
    %134 = vmatpush1.bf16.msra.mxu0 0
    %135 = vmatprep.subr.bf16.mxu0 0
    %136 = vmatpush1.bf16.msra.mxu0 0
    %137 = vmatprep.subr.bf16.mxu0 0
    %138 = vmatpush1.bf16.msra.mxu0 0
    %139 = vmatprep.subr.bf16.mxu0 0
    %140 = vmatpush1.bf16.msra.mxu0 0
    %141 = vmatprep.subr.bf16.mxu0 0
    %142 = vmatpush1.bf16.msra.mxu0 0
    %143 = vmatprep.subr.bf16.mxu0 0
    %144 = vmatpush1.bf16.msra.mxu0 0
    %145 = vmatprep.subr.bf16.mxu0 0
    %146 = vmatpush1.bf16.msra.mxu0 0
    %147 = vmatprep.subr.bf16.mxu0 0
    %148 = vmatpush1.bf16.msra.mxu0 0
    %149 = vmatprep.subr.bf16.mxu0 0
    %150 = vmatpush1.bf16.msra.mxu0 0
    %151 = vmatprep.subr.bf16.mxu0 0
    %152 = vmatpush1.bf16.msra.mxu0 0
    %153 = vmatprep.subr.bf16.mxu0 0
    %154 = vmatpush1.bf16.msra.mxu0 0
    %155 = vmatprep.subr.bf16.mxu0 0
    %156 = vmatpush1.bf16.msra.mxu0 0
    %157 = vmatprep.mubr.bf16.mxu0 0
    %158 = vmatmul.mubr.bf16.gmra.mrb[0].mxu0 %v110
    %v159 = vpop.f32.mrb[0].mxu0
    %v160 = vadd.f32 %v56, %v159
    %v161 = vpop.f32.mrb[0].mxu0
    %v162 = vadd.f32 %v60, %v161
    %v163 = vpop.f32.mrb[0].mxu0
    %v164 = vpop.f32.mrb[0].mxu0
    %165 = vdwg.mxu0
    %166 = vmatprep.subr.bf16.mxu0 %v123
    %167 = vmatpush1.bf16.msra.mxu0 %v120
    %168 = vmatprep.subr.bf16.mxu0 0
    %169 = vmatpush1.bf16.msra.mxu0 0
    %170 = vmatprep.subr.bf16.mxu0 0
    %171 = vmatpush1.bf16.msra.mxu0 0
    %172 = vmatprep.subr.bf16.mxu0 0
    %173 = vmatpush1.bf16.msra.mxu0 0
    %174 = vmatprep.subr.bf16.mxu0 0
    %175 = vmatpush1.bf16.msra.mxu0 0
    %176 = vmatprep.subr.bf16.mxu0 0
    %177 = vmatpush1.bf16.msra.mxu0 0
    %178 = vmatprep.subr.bf16.mxu0 0
    %179 = vmatpush1.bf16.msra.mxu0 0
    %180 = vmatprep.subr.bf16.mxu0 0
    %181 = vmatpush1.bf16.msra.mxu0 0
    %182 = vmatprep.subr.bf16.mxu0 0
    %183 = vmatpush1.bf16.msra.mxu0 0
    %184 = vmatprep.subr.bf16.mxu0 0
    %185 = vmatpush1.bf16.msra.mxu0 0
    %186 = vmatprep.subr.bf16.mxu0 0
    %187 = vmatpush1.bf16.msra.mxu0 0
    %188 = vmatprep.subr.bf16.mxu0 0
    %189 = vmatpush1.bf16.msra.mxu0 0
    %190 = vmatprep.subr.bf16.mxu0 0
    %191 = vmatpush1.bf16.msra.mxu0 0
    %192 = vmatprep.subr.bf16.mxu0 0
    %193 = vmatpush1.bf16.msra.mxu0 0
    %194 = vmatprep.subr.bf16.mxu0 0
    %195 = vmatpush1.bf16.msra.mxu0 0
    %196 = vmatprep.subr.bf16.mxu0 0
    %197 = vmatpush1.bf16.msra.mxu0 0
    %198 = vmatprep.mubr.bf16.mxu0 0
    %199 = vmatmul.mubr.bf16.gmra.mrb[0].mxu0 %v110
    %v200 = vpop.f32.mrb[0].mxu0
    %v201 = vadd.f32 %v64, %v200
    %v202 = vpop.f32.mrb[0].mxu0
    %v203 = vadd.f32 %v68, %v202
    %v204 = vpop.f32.mrb[0].mxu0
    %v205 = vpop.f32.mrb[0].mxu0
    %206 = vdwg.mxu0
    %v207 = vmul.f32 %v160, %v160
    %v208 = vmul.f32 %v162, %v162
    %v209 = vmul.f32 %v201, %v201
    %v210 = vmul.f32 %v203, %v203
    %v211 = vsel %vm112, %v207, 0.0
    %v212 = vsel %vm112, %v208, 0.0
    %v213 = vadd.f32 %v211, %v212
    %v214 = vsel %vm112, %v209, 0.0
    %v215 = vadd.f32 %v213, %v214
    %v216 = vsel %vm112, %v210, 0.0
    %v217 = vadd.f32 %v215, %v216
    %218 = vadd.xlane.f32.xlu0 %v217
    %v219 = vpop.xlane.xlu0 %218
    %v220 = vmax.f32 %v219, 1e-24
    %v221 = vrsqrt.pop %v220
    %v222 = vmul.f32 %v160, %v221
    %v223 = vmul.f32 %v162, %v221
    %v224 = vmul.f32 %v201, %v221
    %v225 = vmul.f32 %v203, %v221
    %v230 = vcombine.low %v222, %v223
    %v231 = vcombine.low %v224, %v225
    %v233 = vunpack.c.l.s4 1983009808
    %v234 = vunpack.c.0.s8 %v233
    %v235 = vlaneseq
    %v236 = vshrl.u32 %v235, 7
    %v237 = vsub.s32 %v234, %v236
    %v238 = vrot.slane %v230, %v237
    %v240 = vunpack.c.l.s4 1983009808
    %v241 = vunpack.c.0.s8 %v240
    %v242 = vlaneseq
    %v243 = vshrl.u32 %v242, 7
    %v244 = vsub.s32 %v241, %v243
    %v245 = vrot.slane %v231, %v244
    %v246 = vcombine.low %v238, %v245
    %248 = vst [vmem:[#allocation4] sm:$0xff] %v246
    %v249 = vpack.c.bf16 %v222, %v222
    %v250 = vpack.c.bf16 %v223, %v223
    %v251 = vpack.c.bf16 %v224, %v224
    %v252 = vpack.c.bf16 %v225, %v225
    %v253 = vld [vmem:[%s3] sm:$0xff]
    %v254 = vld [vmem:[%s3 + $0x8] sm:$0xff]
    %v255 = vld [vmem:[%s3 + $0x10] sm:$0xff]
    %v256 = vld [vmem:[%s3 + $0x18] sm:$0xff]
    %v257 = vld [vmem:[%s3 + $0x20] sm:$0xff]
    %v258 = vld [vmem:[%s3 + $0x28] sm:$0xff]
    %v259 = vld [vmem:[%s3 + $0x30] sm:$0xff]
    %v260 = vld [vmem:[%s3 + $0x38] sm:$0xff]
    %v261 = vld [vmem:[%s3 + $0x40] sm:$0xff]
    %v262 = vld [vmem:[%s3 + $0x48] sm:$0xff]
    %v263 = vld [vmem:[%s3 + $0x50] sm:$0xff]
    %v264 = vld [vmem:[%s3 + $0x58] sm:$0xff]
    %v265 = vld [vmem:[%s3 + $0x60] sm:$0xff]
    %v266 = vld [vmem:[%s3 + $0x68] sm:$0xff]
    %v267 = vld [vmem:[%s3 + $0x70] sm:$0xff]
    %v268 = vld [vmem:[%s3 + $0x78] sm:$0xff]
    %v269 = vld [vmem:[%s3 + $0x80] sm:$0xff]
    %v270 = vld [vmem:[%s3 + $0x88] sm:$0xff]
    %v271 = vld [vmem:[%s3 + $0x90] sm:$0xff]
    %v272 = vld [vmem:[%s3 + $0x98] sm:$0xff]
    %v273 = vld [vmem:[%s3 + $0xa0] sm:$0xff]
    %v274 = vld [vmem:[%s3 + $0xa8] sm:$0xff]
    %v275 = vld [vmem:[%s3 + $0xb0] sm:$0xff]
    %v276 = vld [vmem:[%s3 + $0xb8] sm:$0xff]
    %v277 = vld [vmem:[%s3 + $0xc0] sm:$0xff]
    %v278 = vld [vmem:[%s3 + $0xc8] sm:$0xff]
    %v279 = vld [vmem:[%s3 + $0xd0] sm:$0xff]
    %v280 = vld [vmem:[%s3 + $0xd8] sm:$0xff]
    %v281 = vld [vmem:[%s3 + $0xe0] sm:$0xff]
    %v282 = vld [vmem:[%s3 + $0xe8] sm:$0xff]
    %v283 = vld [vmem:[%s3 + $0xf0] sm:$0xff]
    %v284 = vld [vmem:[%s3 + $0xf8] sm:$0xff]
    %v285 = vld [vmem:[%s4] sm:$0x1]
    %v287 = vlaneseq
    %v288 = vshrl.u32 %v287, 7
    %v289 = vsub.s32 0, %v288
    %v290 = vrot.slane %v285, %v289
    %v324 = vunpack.c.l.b16 %v253
    %v325 = vunpack.c.h.b16 %v253
    %v326 = vunpack.c.l.b16 %v254
    %v327 = vunpack.c.h.b16 %v254
    %v328 = vunpack.c.l.b16 %v255
    %v329 = vunpack.c.h.b16 %v255
    %v330 = vunpack.c.l.b16 %v256
    %v331 = vunpack.c.h.b16 %v256
    %v332 = vunpack.c.l.b16 %v257
    %v333 = vunpack.c.h.b16 %v257
    %v334 = vunpack.c.l.b16 %v258
    %v335 = vunpack.c.h.b16 %v258
    %v336 = vunpack.c.l.b16 %v259
    %v337 = vunpack.c.h.b16 %v259
    %v338 = vunpack.c.l.b16 %v260
    %v339 = vunpack.c.h.b16 %v260
    %v340 = vunpack.c.l.b16 %v261
    %v341 = vunpack.c.h.b16 %v261
    %v342 = vunpack.c.l.b16 %v262
    %v343 = vunpack.c.h.b16 %v262
    %v344 = vunpack.c.l.b16 %v263
    %v345 = vunpack.c.h.b16 %v263
    %v346 = vunpack.c.l.b16 %v264
    %v347 = vunpack.c.h.b16 %v264
    %v348 = vunpack.c.l.b16 %v265
    %v349 = vunpack.c.h.b16 %v265
    %v350 = vunpack.c.l.b16 %v266
    %v351 = vunpack.c.h.b16 %v266
    %v352 = vunpack.c.l.b16 %v267
    %v353 = vunpack.c.h.b16 %v267
    %v354 = vunpack.c.l.b16 %v268
    %v355 = vunpack.c.h.b16 %v268
    %v356 = vunpack.c.l.b16 %v269
    %v357 = vunpack.c.h.b16 %v269
    %v358 = vunpack.c.l.b16 %v270
    %v359 = vunpack.c.h.b16 %v270
    %v360 = vunpack.c.l.b16 %v271
    %v361 = vunpack.c.h.b16 %v271
    %v362 = vunpack.c.l.b16 %v272
    %v363 = vunpack.c.h.b16 %v272
    %v364 = vunpack.c.l.b16 %v273
    %v365 = vunpack.c.h.b16 %v273
    %v366 = vunpack.c.l.b16 %v274
    %v367 = vunpack.c.h.b16 %v274
    %v368 = vunpack.c.l.b16 %v275
    %v369 = vunpack.c.h.b16 %v275
    %v370 = vunpack.c.l.b16 %v276
    %v371 = vunpack.c.h.b16 %v276
    %v372 = vunpack.c.l.b16 %v277
    %v373 = vunpack.c.h.b16 %v277
    %v374 = vunpack.c.l.b16 %v278
    %v375 = vunpack.c.h.b16 %v278
    %v376 = vunpack.c.l.b16 %v279
    %v377 = vunpack.c.h.b16 %v279
    %v378 = vunpack.c.l.b16 %v280
    %v379 = vunpack.c.h.b16 %v280
    %v380 = vunpack.c.l.b16 %v281
    %v381 = vunpack.c.h.b16 %v281
    %v382 = vunpack.c.l.b16 %v282
    %v383 = vunpack.c.h.b16 %v282
    %v384 = vunpack.c.l.b16 %v283
    %v385 = vunpack.c.h.b16 %v283
    %v386 = vunpack.c.l.b16 %v284
    %v387 = vunpack.c.h.b16 %v284
    %v388 = vpack.c.b16 %v328, %v324
    %v389 = vpack.c.b16 %v329, %v325
    %v390 = vpack.c.b16 %v330, %v326
    %v391 = vpack.c.b16 %v331, %v327
    %v392 = vpack.c.b16 %v336, %v332
    %v393 = vpack.c.b16 %v337, %v333
    %v394 = vpack.c.b16 %v338, %v334
    %v395 = vpack.c.b16 %v339, %v335
    %v396 = vpack.c.b16 %v344, %v340
    %v397 = vpack.c.b16 %v345, %v341
    %v398 = vpack.c.b16 %v346, %v342
    %v399 = vpack.c.b16 %v347, %v343
    %v400 = vpack.c.b16 %v352, %v348
    %v401 = vpack.c.b16 %v353, %v349
    %v402 = vpack.c.b16 %v354, %v350
    %v403 = vpack.c.b16 %v355, %v351
    %v404 = vpack.c.b16 %v360, %v356
    %v405 = vpack.c.b16 %v361, %v357
    %v406 = vpack.c.b16 %v362, %v358
    %v407 = vpack.c.b16 %v363, %v359
    %v408 = vpack.c.b16 %v368, %v364
    %v409 = vpack.c.b16 %v369, %v365
    %v410 = vpack.c.b16 %v370, %v366
    %v411 = vpack.c.b16 %v371, %v367
    %v412 = vpack.c.b16 %v376, %v372
    %v413 = vpack.c.b16 %v377, %v373
    %v414 = vpack.c.b16 %v378, %v374
    %v415 = vpack.c.b16 %v379, %v375
    %v416 = vpack.c.b16 %v384, %v380
    %v417 = vpack.c.b16 %v385, %v381
    %v418 = vpack.c.b16 %v386, %v382
    %v419 = vpack.c.b16 %v387, %v383
    %452 = vmatprep.subr.bf16.mxu0 %v389
    %453 = vmatpush1.bf16.xpose.msra.mxu0 %v388
    %454 = vmatprep.subr.bf16.mxu0 %v393
    %455 = vmatpush1.bf16.xpose.msra.mxu0 %v392
    %456 = vmatprep.subr.bf16.mxu0 %v397
    %457 = vmatpush1.bf16.xpose.msra.mxu0 %v396
    %458 = vmatprep.subr.bf16.mxu0 %v401
    %459 = vmatpush1.bf16.xpose.msra.mxu0 %v400
    %460 = vmatprep.subr.bf16.mxu0 %v405
    %461 = vmatpush1.bf16.xpose.msra.mxu0 %v404
    %462 = vmatprep.subr.bf16.mxu0 %v409
    %463 = vmatpush1.bf16.xpose.msra.mxu0 %v408
    %464 = vmatprep.subr.bf16.mxu0 %v413
    %465 = vmatpush1.bf16.xpose.msra.mxu0 %v412
    %466 = vmatprep.subr.bf16.mxu0 %v417
    %467 = vmatpush1.bf16.xpose.msra.mxu0 %v416
    %468 = vmatprep.subr.bf16.mxu0 0
    %469 = vmatpush1.bf16.xpose.msra.mxu0 0
    %470 = vmatprep.subr.bf16.mxu0 0
    %471 = vmatpush1.bf16.xpose.msra.mxu0 0
    %472 = vmatprep.subr.bf16.mxu0 0
    %473 = vmatpush1.bf16.xpose.msra.mxu0 0
    %474 = vmatprep.subr.bf16.mxu0 0
    %475 = vmatpush1.bf16.xpose.msra.mxu0 0
    %476 = vmatprep.subr.bf16.mxu0 0
    %477 = vmatpush1.bf16.xpose.msra.mxu0 0
    %478 = vmatprep.subr.bf16.mxu0 0
    %479 = vmatpush1.bf16.xpose.msra.mxu0 0
    %480 = vmatprep.subr.bf16.mxu0 0
    %481 = vmatpush1.bf16.xpose.msra.mxu0 0
    %482 = vmatprep.subr.bf16.mxu0 0
    %483 = vmatpush1.bf16.xpose.msra.mxu0 0
    %484 = vmatprep.mubr.bf16.mxu0 %v250
    %485 = vmatmul.mubr.bf16.gmra.mrb[0].mxu0 %v249
    %v486 = vpop.f32.mrb[0].mxu0
    %v487 = vadd.f32 %v290, %v486
    %v488 = vpop.f32.mrb[0].mxu0
    %v489 = vpop.f32.mrb[0].mxu0
    %v490 = vpop.f32.mrb[0].mxu0
    %491 = vdwg.mxu0
    %492 = vmatprep.subr.bf16.mxu0 %v391
    %493 = vmatpush1.bf16.xpose.msra.mxu0 %v390
    %494 = vmatprep.subr.bf16.mxu0 %v395
    %495 = vmatpush1.bf16.xpose.msra.mxu0 %v394
    %496 = vmatprep.subr.bf16.mxu0 %v399
    %497 = vmatpush1.bf16.xpose.msra.mxu0 %v398
    %498 = vmatprep.subr.bf16.mxu0 %v403
    %499 = vmatpush1.bf16.xpose.msra.mxu0 %v402
    %500 = vmatprep.subr.bf16.mxu0 %v407
    %501 = vmatpush1.bf16.xpose.msra.mxu0 %v406
    %502 = vmatprep.subr.bf16.mxu0 %v411
    %503 = vmatpush1.bf16.xpose.msra.mxu0 %v410
    %504 = vmatprep.subr.bf16.mxu0 %v415
    %505 = vmatpush1.bf16.xpose.msra.mxu0 %v414
    %506 = vmatprep.subr.bf16.mxu0 %v419
    %507 = vmatpush1.bf16.xpose.msra.mxu0 %v418
    %508 = vmatprep.subr.bf16.mxu0 0
    %509 = vmatpush1.bf16.xpose.msra.mxu0 0
    %510 = vmatprep.subr.bf16.mxu0 0
    %511 = vmatpush1.bf16.xpose.msra.mxu0 0
    %512 = vmatprep.subr.bf16.mxu0 0
    %513 = vmatpush1.bf16.xpose.msra.mxu0 0
    %514 = vmatprep.subr.bf16.mxu0 0
    %515 = vmatpush1.bf16.xpose.msra.mxu0 0
    %516 = vmatprep.subr.bf16.mxu0 0
    %517 = vmatpush1.bf16.xpose.msra.mxu0 0
    %518 = vmatprep.subr.bf16.mxu0 0
    %519 = vmatpush1.bf16.xpose.msra.mxu0 0
    %520 = vmatprep.subr.bf16.mxu0 0
    %521 = vmatpush1.bf16.xpose.msra.mxu0 0
    %522 = vmatprep.subr.bf16.mxu0 0
    %523 = vmatpush1.bf16.xpose.msra.mxu0 0
    %524 = vmatprep.mubr.bf16.mxu0 %v252
    %525 = vmatmul.mubr.bf16.gmra.mrb[0].mxu0 %v251
    %v526 = vpop.f32.mrb[0].mxu0
    %v527 = vadd.f32 %v487, %v526
    %v528 = vpop.f32.mrb[0].mxu0
    %v529 = vpop.f32.mrb[0].mxu0
    %v530 = vpop.f32.mrb[0].mxu0
    %531 = vdwg.mxu0
    %532 = vst [vmem:[#allocation2] sm:$0x3] %v527
    // Predicated region
    $region22: #{facenet_classifier_forward.1} parent=1 // pred_check
      _
    $region23: #{facenet_classifier_forward.1} parent=1 // pred_check_branch
      %534 = sbr.rel (0) target = $region25
    $region24: #{facenet_classifier_forward.1} parent=1 // pred_region
      %s536 = ssub.s32 32, 32
      %537 = vsyncadd [#allocation3], %s536
      %s539 = sshll.u32 [#allocation2], 4
      %s540 = int_to_ptr.vmem [resolvable:$true] %s539
      %542 = dma.vmem_to_hbm [thread:$0]  %s540, 32, %s5, [#allocation3]
    $region25: #{facenet_classifier_forward.1} parent=1 // pred_fallthru
      _
    // Predicated region
    $region26: #{facenet_classifier_forward.1} parent=1 // pred_check
      _
    $region27: #{facenet_classifier_forward.1} parent=1 // pred_check_branch
      %544 = sbr.rel (0) target = $region29
    $region28: #{facenet_classifier_forward.1} parent=1 // pred_region
      %s546 = ssub.s32 128, 128
      %547 = vsyncadd [#allocation5], %s546
      %s549 = sshll.u32 [#allocation4], 4
      %s550 = int_to_ptr.vmem [resolvable:$true] %s549
      %552 = dma.vmem_to_hbm [thread:$0]  %s550, 128, %s6, [#allocation5]
    $region29: #{facenet_classifier_forward.1} parent=1 // pred_fallthru
      _
    // Predicated region
    $region30: #{facenet_classifier_forward.1} parent=1 // pred_check
      _
    $region31: #{facenet_classifier_forward.1} parent=1 // pred_check_branch
      %554 = sbr.rel (0) target = $region33
    $region32: #{facenet_classifier_forward.1} parent=1 // pred_region
      %555 = dma.done [#allocation3], 32
    $region33: #{facenet_classifier_forward.1} parent=1 // pred_fallthru
      _
    // Predicated region
    $region34: #{facenet_classifier_forward.1} parent=1 // pred_check
      _
    $region35: #{facenet_classifier_forward.1} parent=1 // pred_check_branch
      %557 = sbr.rel (0) target = $region37
    $region36: #{facenet_classifier_forward.1} parent=1 // pred_region
      %558 = dma.done [#allocation5], 128
    $region37: #{facenet_classifier_forward.1} parent=1 // pred_fallthru
      _
    %559 = vsyncpa [#allocation3], 1
    %560 = vsyncpa [#allocation5], 1

</llo_original>
